<compile_context>
chip_gen: v5e
topology: v5e:2x2
jax: 0.10.0
libtpu: 0.0.40
codegen_flags: <defaults>
</compile_context>

<pallas_src>
import jax
import jax.numpy as jnp
from jax.experimental import pallas as pl
from jax.experimental.pallas import tpu as pltpu


def se_gate_mul_kernel(s_ref, w_ref, b_ref, x_ref, o_ref):
    # s_ref : (1, Cin)   -- squeeze vector (pre-ReLU), resident across tiles
    # w_ref : (CT, Cin)  -- 1x1 conv weight rows for this channel tile
    # b_ref : (CT, 1)    -- conv bias for this channel tile
    # x_ref : (CT, HW)   -- feature-map tile to be gated
    # o_ref : (CT, HW)
    s = jnp.maximum(s_ref[...], 0.0)                                   # ReLU (VPU)
    # Per-channel dot product: VPU multiply + XLU lane-reduce (no MXU traffic).
    y = jnp.sum(w_ref[...] * s, axis=-1, keepdims=True) + b_ref[...]   # (CT, 1)
    g = jnp.clip(y * (1.0 / 6.0) + 0.5, 0.0, 1.0)                      # Hardsigmoid
    o_ref[...] = (g * x_ref[...]).astype(o_ref.dtype)                  # gate over HW


def se_gate_mul(x63, x61, weight, bias, *, channel_tile=40):
    """x63: (1, Cin, 1, 1), x61: (1, Cout, H, W), weight: (Cout, Cin, 1, 1), bias: (Cout,)."""
    n, cin, _, _ = x63.shape
    nb, cout, h, w = x61.shape
    assert n == 1 and nb == 1
    hw = h * w

    ct = channel_tile
    assert cout % ct == 0 and ct % 8 == 0, "channel tile must divide Cout and be sublane-aligned"
    n_tiles = cout // ct

    s_row = x63.reshape(1, cin)
    wmat = weight.reshape(cout, cin)
    bcol = bias.reshape(cout, 1)
    xflat = x61.reshape(cout, hw)

    dtype_size = jnp.dtype(xflat.dtype).itemsize
    cost = pl.CostEstimate(
        flops=2 * cout * cin + 5 * cout * hw,
        transcendentals=0,
        bytes_accessed=2 * cout * hw * dtype_size + cout * cin * dtype_size,
    )

    out_flat = pl.pallas_call(
        se_gate_mul_kernel,
        out_shape=jax.ShapeDtypeStruct((cout, hw), xflat.dtype),
        grid=(n_tiles,),
        in_specs=[
            pl.BlockSpec((1, cin), lambda i: (0, 0)),    # squeeze vector (shared / resident)
            pl.BlockSpec((ct, cin), lambda i: (i, 0)),   # weight rows for this tile
            pl.BlockSpec((ct, 1), lambda i: (i, 0)),     # bias rows for this tile
            pl.BlockSpec((ct, hw), lambda i: (i, 0)),    # feature-map tile
        ],
        out_specs=pl.BlockSpec((ct, hw), lambda i: (i, 0)),
        compiler_params=pltpu.CompilerParams(
            dimension_semantics=("parallel",),
        ),
        cost_estimate=cost,
    )(s_row, wmat, bcol, xflat)

    return out_flat.reshape(1, cout, h, w)


def reference(x63, x61, weight, bias):
    s = jnp.maximum(x63.reshape(-1), 0.0)
    y = weight.reshape(weight.shape[0], -1) @ s + bias
    g = jnp.clip(y / 6.0 + 0.5, 0.0, 1.0)
    return g[None, :, None, None] * x61


if __name__ == "__main__":
    key = jax.random.PRNGKey(0)
    k1, k2, k3, k4 = jax.random.split(key, 4)

    CIN, COUT, H, W = 32, 120, 28, 28
    x63 = jax.random.normal(k1, (1, CIN, 1, 1), dtype=jnp.float32)
    x61 = jax.random.normal(k2, (1, COUT, H, W), dtype=jnp.float32)
    # Deterministic synthetic conv params (Conv2d(32, 120, kernel_size=1))
    weight = jax.random.normal(k3, (COUT, CIN, 1, 1), dtype=jnp.float32) * 0.1
    bias = jax.random.normal(k4, (COUT,), dtype=jnp.float32) * 0.1

    out = se_gate_mul(x63, x61, weight, bias)
    jax.block_until_ready(out)

    ref = reference(x63, x61, weight, bias)
    assert out.shape == (1, COUT, H, W)
    assert jnp.allclose(out, ref, atol=1e-5, rtol=1e-5)
    print("KERNEL_OK")
</pallas_src>

<mosaic_0001>
module attributes {stable_mosaic.version = 11 : i64} {
  func.func @se_gate_mul_kernel(%arg0: i32, %arg1: memref<1x32xf32, #tpu.memory_space<vmem>>, %arg2: memref<40x32xf32, #tpu.memory_space<vmem>>, %arg3: memref<40x1xf32, #tpu.memory_space<vmem>>, %arg4: memref<40x784xf32, #tpu.memory_space<vmem>>, %arg5: memref<40x784xf32, #tpu.memory_space<vmem>>) attributes {dimension_semantics = [#tpu.dimension_semantics<parallel>], iteration_bounds = array<i64: 3>, scalar_prefetch = 0 : i64, scratch_operands = 0 : i64, tpu.core_type = #tpu.core_type<tc>, window_params = [{pipeline_mode = #tpu.pipeline_mode<synchronous>, transform_indices = @transform_0, window_bounds = array<i64: 1, 32>}, {transform_indices = @transform_1, window_bounds = array<i64: 40, 32>}, {transform_indices = @transform_2, window_bounds = array<i64: 40, 1>}, {transform_indices = @transform_3, window_bounds = array<i64: 40, 784>}, {transform_indices = @transform_4, window_bounds = array<i64: 40, 784>}]} {
    %c0 = arith.constant 0 : index
    %c0_0 = arith.constant 0 : index
    %0 = vector.load %arg1[%c0, %c0_0] : memref<1x32xf32, #tpu.memory_space<vmem>>, vector<1x32xf32>
    %cst = arith.constant 0.000000e+00 : f32
    %1 = vector.broadcast %cst : f32 to vector<1x32xf32>
    %2 = arith.maximumf %0, %1 : vector<1x32xf32>
    %c0_1 = arith.constant 0 : index
    %c0_2 = arith.constant 0 : index
    %3 = vector.load %arg2[%c0_1, %c0_2] : memref<40x32xf32, #tpu.memory_space<vmem>>, vector<40x32xf32>
    %4 = vector.broadcast %2 : vector<1x32xf32> to vector<40x32xf32>
    %5 = arith.mulf %3, %4 : vector<40x32xf32>
    %cst_3 = arith.constant dense<0.000000e+00> : vector<40xf32>
    %6 = vector.multi_reduction <add>, %5, %cst_3 [1] : vector<40x32xf32> to vector<40xf32>
    %7 = vector.shape_cast %6 : vector<40xf32> to vector<40x1xf32>
    %c0_4 = arith.constant 0 : index
    %c0_5 = arith.constant 0 : index
    %8 = vector.load %arg3[%c0_4, %c0_5] : memref<40x1xf32, #tpu.memory_space<vmem>>, vector<40x1xf32>
    %9 = arith.addf %7, %8 : vector<40x1xf32>
    %cst_6 = arith.constant 0.166666672 : f32
    %10 = vector.broadcast %cst_6 : f32 to vector<40x1xf32>
    %11 = arith.mulf %9, %10 : vector<40x1xf32>
    %cst_7 = arith.constant 5.000000e-01 : f32
    %12 = vector.broadcast %cst_7 : f32 to vector<40x1xf32>
    %13 = arith.addf %11, %12 : vector<40x1xf32>
    %cst_8 = arith.constant 0.000000e+00 : f32
    %cst_9 = arith.constant 1.000000e+00 : f32
    %14 = vector.broadcast %cst_8 : f32 to vector<40x1xf32>
    %15 = arith.maximumf %14, %13 : vector<40x1xf32>
    %16 = vector.broadcast %cst_9 : f32 to vector<40x1xf32>
    %17 = arith.minimumf %16, %15 : vector<40x1xf32>
    %c0_10 = arith.constant 0 : index
    %c0_11 = arith.constant 0 : index
    %18 = vector.load %arg4[%c0_10, %c0_11] : memref<40x784xf32, #tpu.memory_space<vmem>>, vector<40x784xf32>
    %19 = vector.broadcast %17 : vector<40x1xf32> to vector<40x784xf32>
    %20 = arith.mulf %19, %18 : vector<40x784xf32>
    %c0_12 = arith.constant 0 : index
    %c0_13 = arith.constant 0 : index
    %21 = vector.load %arg5[%c0_12, %c0_13] : memref<40x784xf32, #tpu.memory_space<vmem>>, vector<40x784xf32>
    tpu.vector_store %arg5[%c0_12, %c0_13], %20 {strides = array<i32>} : memref<40x784xf32, #tpu.memory_space<vmem>>, vector<40x784xf32>,
    return
  }
  func.func @transform_0(%arg0: i32) -> (i32, i32) {
    %c0_i32 = arith.constant 0 : i32
    %c0_i32_0 = arith.constant 0 : i32
    %c0_i32_1 = arith.constant 0 : i32
    return %c0_i32, %c0_i32_0 : i32, i32
  }
  func.func @transform_1(%arg0: i32) -> (i32, i32) {
    %c0_i32 = arith.constant 0 : i32
    %c0_i32_0 = arith.constant 0 : i32
    return %arg0, %c0_i32 : i32, i32
  }
  func.func @transform_2(%arg0: i32) -> (i32, i32) {
    %c0_i32 = arith.constant 0 : i32
    %c0_i32_0 = arith.constant 0 : i32
    return %arg0, %c0_i32 : i32, i32
  }
  func.func @transform_3(%arg0: i32) -> (i32, i32) {
    %c0_i32 = arith.constant 0 : i32
    %c0_i32_0 = arith.constant 0 : i32
    return %arg0, %c0_i32 : i32, i32
  }
  func.func @transform_4(%arg0: i32) -> (i32, i32) {
    %c0_i32 = arith.constant 0 : i32
    %c0_i32_0 = arith.constant 0 : i32
    return %arg0, %c0_i32 : i32, i32
  }
}

</mosaic_0001>

<llo_original>
// kernel: tpu_custom_call.1
$region0: #{tpu_custom_call.1}
  #allocation0 [shape = 'u32[]', space=smem, size = 0x4, offset = 0x4, fixed_abs, tag = 'smem constant byte address 0x4 - core index']
  #allocation1 [shape = 'u32[72,128]{1,0:T(1,128)}', space=vmem, size = 0x9000, scoped, tag = 'internal scratch']
  %s0 = inlined_call_operand.vmem [shape: f32[1,32], index: 0, kind: input, shape index: {}]
  %s1 = inlined_call_operand.vmem [shape: f32[120,32], index: 1, kind: input, shape index: {}]
  %s2 = inlined_call_operand.vmem [shape: f32[120,1], index: 2, kind: input, shape index: {}]
  %s3 = inlined_call_operand.vmem [shape: f32[120,784], index: 3, kind: input, shape index: {}]
  %s4 = inlined_call_operand.vmem [shape: f32[120,784], index: 4, kind: output, shape index: {}]
  %s5 = sld [smem:[#allocation0]]
  $region49: #{tpu_custom_call.1} parent=0
    _
  %s7 = ssub.s32 1, %s5
  %s8 = scalar_select 0, %s7, %s5
  loop: start=0, step=1, limit=5
  $region2: #{tpu_custom_call.1} parent=0 // loop_pre_header
    _
  $region3: #{tpu_custom_call.1} parent=0 // loop_header
    %s10 = sphi 0, %s14
    %p11 = scmp.ge.s32.totalorder %s10, 5
    %s18 = sphi 0, %s18
    %s20 = sphi 0, %s18
    %s21 = sphi 0, %s20
    %s35 = sphi 0, %s21
    %s41 = sphi 0, %s43
    %s44 = sphi 0, %s41
    %s45 = sphi 0, %s44
    %s61 = sphi 0, %s45
    %s67 = sphi 0, %s69
    %s70 = sphi 0, %s67
    %s71 = sphi 0, %s70
    %s87 = sphi 0, %s71
    %s93 = sphi 0, %s95
    %s96 = sphi 0, %s93
    %s97 = sphi 0, %s96
    %s113 = sphi 0, %s97
    %s119 = sphi 0, %s121
    %s122 = sphi 0, %s119
    %s123 = sphi 0, %s122
    %s139 = sphi 0, %s123
  $region4: #{tpu_custom_call.1} parent=0 // loop_header_branch
    %13 = sbr.rel (%p11) target = $region8
  $region5: #{tpu_custom_call.1} parent=0 // loop_body
    %s15 = ssub.s32 %s10, 1
    %s16 = ssub.s32 %s10, 2
    %s17 = sadd.s32 %s10, 1
    %s19 = sadd.s32 %s18, 1
    %p22 = scmp.eq.s32.totalorder %s10, 2
    %p23 = scmp.ne.s32.totalorder %s18, %s20
    %p24 = scmp.eq.s32.totalorder %s10, 0
    %p25 = por %p23, %p24
    %p26 = scmp.ne.s32.totalorder %s18, %s20
    %p27 = scmp.eq.s32.totalorder %s15, 2
    %p28 = por %p26, %p27
    %p29 = scmp.ne.s32.totalorder %s20, %s21
    %p30 = scmp.eq.s32.totalorder %s15, 0
    %p31 = por %p29, %p30
    %p32 = scmp.ne.s32.totalorder %s20, %s21
    %p33 = scmp.eq.s32.totalorder %s16, 2
    %p34 = por %p32, %p33
    %p36 = scmp.ne.s32.totalorder %s21, %s35
    %p37 = scmp.eq.s32.totalorder %s16, 0
    %p38 = por %p36, %p37
    %s39 = ssub.s32 %s10, %s17
    %p40 = scmp.eq.s32.totalorder %s39, 0
    %s42 = sadd.s32 %s41, 1
    %s43 = scalar_select %p40, %s41, %s42
    %p46 = pneg %p40
    %p47 = scmp.eq.s32.totalorder %s10, 2
    %p48 = por %p46, %p47
    %p49 = scmp.ne.s32.totalorder %s41, %s44
    %p50 = scmp.eq.s32.totalorder %s10, 0
    %p51 = por %p49, %p50
    %p52 = scmp.ne.s32.totalorder %s41, %s44
    %p53 = scmp.eq.s32.totalorder %s15, 2
    %p54 = por %p52, %p53
    %p55 = scmp.ne.s32.totalorder %s44, %s45
    %p56 = scmp.eq.s32.totalorder %s15, 0
    %p57 = por %p55, %p56
    %p58 = scmp.ne.s32.totalorder %s44, %s45
    %p59 = scmp.eq.s32.totalorder %s16, 2
    %p60 = por %p58, %p59
    %p62 = scmp.ne.s32.totalorder %s45, %s61
    %p63 = scmp.eq.s32.totalorder %s16, 0
    %p64 = por %p62, %p63
    %s65 = ssub.s32 %s10, %s17
    %p66 = scmp.eq.s32.totalorder %s65, 0
    %s68 = sadd.s32 %s67, 1
    %s69 = scalar_select %p66, %s67, %s68
    %p72 = pneg %p66
    %p73 = scmp.eq.s32.totalorder %s10, 2
    %p74 = por %p72, %p73
    %p75 = scmp.ne.s32.totalorder %s67, %s70
    %p76 = scmp.eq.s32.totalorder %s10, 0
    %p77 = por %p75, %p76
    %p78 = scmp.ne.s32.totalorder %s67, %s70
    %p79 = scmp.eq.s32.totalorder %s15, 2
    %p80 = por %p78, %p79
    %p81 = scmp.ne.s32.totalorder %s70, %s71
    %p82 = scmp.eq.s32.totalorder %s15, 0
    %p83 = por %p81, %p82
    %p84 = scmp.ne.s32.totalorder %s70, %s71
    %p85 = scmp.eq.s32.totalorder %s16, 2
    %p86 = por %p84, %p85
    %p88 = scmp.ne.s32.totalorder %s71, %s87
    %p89 = scmp.eq.s32.totalorder %s16, 0
    %p90 = por %p88, %p89
    %s91 = ssub.s32 %s10, %s17
    %p92 = scmp.eq.s32.totalorder %s91, 0
    %s94 = sadd.s32 %s93, 1
    %s95 = scalar_select %p92, %s93, %s94
    %p98 = pneg %p92
    %p99 = scmp.eq.s32.totalorder %s10, 2
    %p100 = por %p98, %p99
    %p101 = scmp.ne.s32.totalorder %s93, %s96
    %p102 = scmp.eq.s32.totalorder %s10, 0
    %p103 = por %p101, %p102
    %p104 = scmp.ne.s32.totalorder %s93, %s96
    %p105 = scmp.eq.s32.totalorder %s15, 2
    %p106 = por %p104, %p105
    %p107 = scmp.ne.s32.totalorder %s96, %s97
    %p108 = scmp.eq.s32.totalorder %s15, 0
    %p109 = por %p107, %p108
    %p110 = scmp.ne.s32.totalorder %s96, %s97
    %p111 = scmp.eq.s32.totalorder %s16, 2
    %p112 = por %p110, %p111
    %p114 = scmp.ne.s32.totalorder %s97, %s113
    %p115 = scmp.eq.s32.totalorder %s16, 0
    %p116 = por %p114, %p115
    %s117 = ssub.s32 %s10, %s17
    %p118 = scmp.eq.s32.totalorder %s117, 0
    %s120 = sadd.s32 %s119, 1
    %s121 = scalar_select %p118, %s119, %s120
    %p124 = pneg %p118
    %p125 = scmp.eq.s32.totalorder %s10, 2
    %p126 = por %p124, %p125
    %p127 = scmp.ne.s32.totalorder %s119, %s122
    %p128 = scmp.eq.s32.totalorder %s10, 0
    %p129 = por %p127, %p128
    %p130 = scmp.ne.s32.totalorder %s119, %s122
    %p131 = scmp.eq.s32.totalorder %s15, 2
    %p132 = por %p130, %p131
    %p133 = scmp.ne.s32.totalorder %s122, %s123
    %p134 = scmp.eq.s32.totalorder %s15, 0
    %p135 = por %p133, %p134
    %p136 = scmp.ne.s32.totalorder %s122, %s123
    %p137 = scmp.eq.s32.totalorder %s16, 2
    %p138 = por %p136, %p137
    %p140 = scmp.ne.s32.totalorder %s123, %s139
    %p141 = scmp.eq.s32.totalorder %s16, 0
    %p142 = por %p140, %p141
    %p143 = scmp.le.s32.totalorder 1, %s10
    %p144 = scmp.lt.s32.totalorder %s10, 4
    %p145 = pnand %p143, %p144
    %p146 = pneg %p145
    // Predicated region
    $region9: #{tpu_custom_call.1} parent=5 // pred_check
      _
    $region10: #{tpu_custom_call.1} parent=5 // pred_check_branch
      %148 = sbr.rel (%p145) target = $region12
    $region11: #{tpu_custom_call.1} parent=5 // pred_region
      %s149 = ssub.s32 %s10, 1
      // Predicated region
      $region13: #{tpu_custom_call.1} parent=11 // pred_check
        %p150 = pneg %p31
      $region14: #{tpu_custom_call.1} parent=11 // pred_check_branch
        %152 = sbr.rel (%p150) target = $region16
      $region15: #{tpu_custom_call.1} parent=11 // pred_region
        _
      $region16: #{tpu_custom_call.1} parent=11 // pred_fallthru
        _
    $region12: #{tpu_custom_call.1} parent=5 // pred_fallthru
      _
    %p153 = scmp.lt.s32.totalorder %s10, 3
    // Predicated region
    $region17: #{tpu_custom_call.1} parent=5 // pred_check
      %p154 = pneg %p153
    $region18: #{tpu_custom_call.1} parent=5 // pred_check_branch
      %156 = sbr.rel (%p154) target = $region20
    $region19: #{tpu_custom_call.1} parent=5 // pred_region
      // Predicated region
      $region21: #{tpu_custom_call.1} parent=19 // pred_check
        %p157 = pneg %p51
      $region22: #{tpu_custom_call.1} parent=19 // pred_check_branch
        %159 = sbr.rel (%p157) target = $region24
      $region23: #{tpu_custom_call.1} parent=19 // pred_region
        %s160 = smul.u32 5, %s10
        %p161 = scmp.lt.s32.totalorder %s160, 14
        %s162 = scalar_select %p161, %s160, 14
        %s163 = smul.addr %s162, 8
        %s164 = scalar_lea.vmem %s1, %s163
        %s165 = smul.u32 5, %s10
      $region24: #{tpu_custom_call.1} parent=19 // pred_fallthru
        _
      // Predicated region
      $region25: #{tpu_custom_call.1} parent=19 // pred_check
        %p166 = pneg %p77
      $region26: #{tpu_custom_call.1} parent=19 // pred_check_branch
        %168 = sbr.rel (%p166) target = $region28
      $region27: #{tpu_custom_call.1} parent=19 // pred_region
        %s169 = smul.u32 5, %s10
        %p170 = scmp.lt.s32.totalorder %s169, 14
        %s171 = scalar_select %p170, %s169, 14
        %s172 = smul.addr %s171, 8
        %s173 = scalar_lea.vmem %s2, %s172
        %s174 = smul.u32 5, %s10
      $region28: #{tpu_custom_call.1} parent=19 // pred_fallthru
        _
      // Predicated region
      $region29: #{tpu_custom_call.1} parent=19 // pred_check
        %p175 = pneg %p103
      $region30: #{tpu_custom_call.1} parent=19 // pred_check_branch
        %177 = sbr.rel (%p175) target = $region32
      $region31: #{tpu_custom_call.1} parent=19 // pred_region
        %s178 = smul.u32 5, %s10
        %p179 = scmp.lt.s32.totalorder %s178, 14
        %s180 = scalar_select %p179, %s178, 14
        %s181 = smul.addr %s180, 7
        %s182 = smul.addr %s181, 8
        %s183 = scalar_lea.vmem %s3, %s182
        %s184 = smul.u32 5, %s10
      $region32: #{tpu_custom_call.1} parent=19 // pred_fallthru
        _
    $region20: #{tpu_custom_call.1} parent=5 // pred_fallthru
      _
    %p185 = scmp.le.s32.totalorder 1, %s10
    %p186 = scmp.lt.s32.totalorder %s10, 4
    %p187 = pnand %p185, %p186
    %p188 = pneg %p187
    // Predicated region
    $region33: #{tpu_custom_call.1} parent=5 // pred_check
      _
    $region34: #{tpu_custom_call.1} parent=5 // pred_check_branch
      %190 = sbr.rel (%p187) target = $region36
    $region35: #{tpu_custom_call.1} parent=5 // pred_region
      %s191 = ssub.s32 %s10, 1
      %p192 = pneg %p31
      %p193 = pneg %p28
      %s194 = smul.u32 5, %s15
      %p195 = scmp.lt.s32.totalorder %s194, 14
      %s196 = scalar_select %p195, %s194, 14
      %s197 = smul.addr %s196, 8
      %s198 = scalar_lea.vmem %s1, %s197
      %p199 = pneg %p57
      %p200 = pneg %p54
      %s201 = smul.u32 5, %s15
      %p202 = scmp.lt.s32.totalorder %s201, 14
      %s203 = scalar_select %p202, %s201, 14
      %s204 = smul.addr %s203, 8
      %s205 = scalar_lea.vmem %s2, %s204
      %p206 = pneg %p83
      %p207 = pneg %p80
      %s208 = smul.u32 5, %s15
      %p209 = scmp.lt.s32.totalorder %s208, 14
      %s210 = scalar_select %p209, %s208, 14
      %s211 = smul.addr %s210, 7
      %s212 = smul.addr %s211, 8
      %s213 = scalar_lea.vmem %s3, %s212
      %p214 = pneg %p109
      %p215 = pneg %p106
      %p216 = pneg %p135
      %p217 = pneg %p132
      %s218 = smul.u32 5, %s15
      %p219 = scmp.lt.s32.totalorder %s218, 14
      %s220 = scalar_select %p219, %s218, 14
      %s221 = smul.addr %s220, 7
      %s222 = smul.addr %s221, 8
      %s223 = scalar_lea.vmem %s4, %s222
      %s224 = smul.u32 5, %s15
      %p225 = scmp.lt.s32.totalorder %s224, 14
      %s226 = scalar_select %p225, %s224, 14
      %s227 = smul.addr %s226, 8
      %s228 = scalar_lea.vmem %s1, %s227
      %s229 = smul.u32 5, %s15
      %s230 = smul.u32 5, %s15
      %p231 = scmp.lt.s32.totalorder %s230, 14
      %s232 = scalar_select %p231, %s230, 14
      %s233 = smul.addr %s232, 8
      %s234 = scalar_lea.vmem %s2, %s233
      %s235 = smul.u32 5, %s15
      %s236 = smul.u32 5, %s15
      %p237 = scmp.lt.s32.totalorder %s236, 14
      %s238 = scalar_select %p237, %s236, 14
      %s239 = smul.addr %s238, 7
      %s240 = smul.addr %s239, 8
      %s241 = scalar_lea.vmem %s3, %s240
      %s242 = smul.u32 5, %s15
      %s243 = smul.u32 5, %s15
      %p244 = scmp.lt.s32.totalorder %s243, 14
      %s245 = scalar_select %p244, %s243, 14
      %s246 = smul.addr %s245, 7
      %s247 = smul.addr %s246, 8
      %s248 = scalar_lea.vmem %s4, %s247
      %s249 = smul.u32 5, %s15
      %v250 = vld [vmem:[%s0] sm:$0x1]
      %v251 = vmax.f32 %v250, 0.0
      %v252 = vld [vmem:[%s228] sm:$0xff]
      %v253 = vld [vmem:[%s228 + $0x8] sm:$0xff]
      %v254 = vld [vmem:[%s228 + $0x10] sm:$0xff]
      %v255 = vld [vmem:[%s228 + $0x18] sm:$0xff]
      %v256 = vld [vmem:[%s228 + $0x20] sm:$0xff]
      %v258 = vperm.slane %v251, 0
      %v260 = vmul.f32 %v252, %v258
      %v261 = vmul.f32 %v253, %v258
      %v262 = vmul.f32 %v254, %v258
      %v263 = vmul.f32 %v255, %v258
      %v264 = vmul.f32 %v256, %v258
      %vm265 = vcmask 261120
      %v266 = vsel %vm265, %v260, 0.0
      %267 = vadd.xlane.f32.xlu0 %v266
      %v268 = vpop.xlane.xlu0 %267
      %v269 = vsel %vm265, %v261, 0.0
      %270 = vadd.xlane.f32.xlu0 %v269
      %v271 = vpop.xlane.xlu0 %270
      %v272 = vsel %vm265, %v262, 0.0
      %273 = vadd.xlane.f32.xlu0 %v272
      %v274 = vpop.xlane.xlu0 %273
      %v275 = vsel %vm265, %v263, 0.0
      %276 = vadd.xlane.f32.xlu0 %v275
      %v277 = vpop.xlane.xlu0 %276
      %v278 = vsel %vm265, %v264, 0.0
      %279 = vadd.xlane.f32.xlu0 %v278
      %v280 = vpop.xlane.xlu0 %279
      %v281 = vld [vmem:[%s234] sm:$0xff]
      %v282 = vld [vmem:[%s234 + $0x8] sm:$0xff]
      %v283 = vld [vmem:[%s234 + $0x10] sm:$0xff]
      %v284 = vld [vmem:[%s234 + $0x18] sm:$0xff]
      %v285 = vld [vmem:[%s234 + $0x20] sm:$0xff]
      %v286 = vadd.f32 %v268, %v281
      %v287 = vadd.f32 %v271, %v282
      %v288 = vadd.f32 %v274, %v283
      %v289 = vadd.f32 %v277, %v284
      %v290 = vadd.f32 %v280, %v285
      %v291 = vmul.f32 %v286, 0.16666667
      %v292 = vmul.f32 %v287, 0.16666667
      %v293 = vmul.f32 %v288, 0.16666667
      %v294 = vmul.f32 %v289, 0.16666667
      %v295 = vmul.f32 %v290, 0.16666667
      %v296 = vadd.f32 %v291, 0.5
      %v297 = vadd.f32 %v292, 0.5
      %v298 = vadd.f32 %v293, 0.5
      %v299 = vadd.f32 %v294, 0.5
      %v300 = vadd.f32 %v295, 0.5
      %v301 = vmax.f32 %v296, 0.0
      %v302 = vmax.f32 %v297, 0.0
      %v303 = vmax.f32 %v298, 0.0
      %v304 = vmax.f32 %v299, 0.0
      %v305 = vmax.f32 %v300, 0.0
      %v306 = vmin.f32 %v301, 1.0
      %v307 = vmin.f32 %v302, 1.0
      %v308 = vmin.f32 %v303, 1.0
      %v309 = vmin.f32 %v304, 1.0
      %v310 = vmin.f32 %v305, 1.0
      %v311 = vld [vmem:[%s241] sm:$0xff]
      %v312 = vld [vmem:[%s241 + $0x8] sm:$0xff]
      %v313 = vld [vmem:[%s241 + $0x10] sm:$0xff]
      %v314 = vld [vmem:[%s241 + $0x18] sm:$0xff]
      %v315 = vld [vmem:[%s241 + $0x20] sm:$0xff]
      %v316 = vld [vmem:[%s241 + $0x28] sm:$0xff]
      %v317 = vld [vmem:[%s241 + $0x30] sm:$0xff]
      %v318 = vld [vmem:[%s241 + $0x38] sm:$0xff]
      %v319 = vld [vmem:[%s241 + $0x40] sm:$0xff]
      %v320 = vld [vmem:[%s241 + $0x48] sm:$0xff]
      %v321 = vld [vmem:[%s241 + $0x50] sm:$0xff]
      %v322 = vld [vmem:[%s241 + $0x58] sm:$0xff]
      %v323 = vld [vmem:[%s241 + $0x60] sm:$0xff]
      %v324 = vld [vmem:[%s241 + $0x68] sm:$0xff]
      %v325 = vld [vmem:[%s241 + $0x70] sm:$0xff]
      %v326 = vld [vmem:[%s241 + $0x78] sm:$0xff]
      %v327 = vld [vmem:[%s241 + $0x80] sm:$0xff]
      %v328 = vld [vmem:[%s241 + $0x88] sm:$0xff]
      %v329 = vld [vmem:[%s241 + $0x90] sm:$0xff]
      %v330 = vld [vmem:[%s241 + $0x98] sm:$0xff]
      %v331 = vld [vmem:[%s241 + $0xa0] sm:$0xff]
      %v332 = vld [vmem:[%s241 + $0xa8] sm:$0xff]
      %v333 = vld [vmem:[%s241 + $0xb0] sm:$0xff]
      %v334 = vld [vmem:[%s241 + $0xb8] sm:$0xff]
      %v335 = vld [vmem:[%s241 + $0xc0] sm:$0xff]
      %v336 = vld [vmem:[%s241 + $0xc8] sm:$0xff]
      %v337 = vld [vmem:[%s241 + $0xd0] sm:$0xff]
      %v338 = vld [vmem:[%s241 + $0xd8] sm:$0xff]
      %v339 = vld [vmem:[%s241 + $0xe0] sm:$0xff]
      %v340 = vld [vmem:[%s241 + $0xe8] sm:$0xff]
      %v341 = vld [vmem:[%s241 + $0xf0] sm:$0xff]
      %v342 = vld [vmem:[%s241 + $0xf8] sm:$0xff]
      %v343 = vld [vmem:[%s241 + $0x100] sm:$0xff]
      %v344 = vld [vmem:[%s241 + $0x108] sm:$0xff]
      %v345 = vld [vmem:[%s241 + $0x110] sm:$0xff]
      %347 = vset.pattern.permute.xlu0 0
      %348 = vperm.xlu0 %347, %v306
      %v349 = vpop.permute.xlu0 %348
      %352 = vset.pattern.permute.xlu0 0
      %353 = vperm.xlu0 %352, %v307
      %v354 = vpop.permute.xlu0 %353
      %357 = vset.pattern.permute.xlu0 0
      %358 = vperm.xlu0 %357, %v308
      %v359 = vpop.permute.xlu0 %358
      %362 = vset.pattern.permute.xlu0 0
      %363 = vperm.xlu0 %362, %v309
      %v364 = vpop.permute.xlu0 %363
      %367 = vset.pattern.permute.xlu0 0
      %368 = vperm.xlu0 %367, %v310
      %v369 = vpop.permute.xlu0 %368
      %v371 = vmul.f32 %v349, %v311
      %v372 = vmul.f32 %v349, %v312
      %v373 = vmul.f32 %v349, %v313
      %v374 = vmul.f32 %v349, %v314
      %v375 = vmul.f32 %v349, %v315
      %v376 = vmul.f32 %v349, %v316
      %v377 = vmul.f32 %v349, %v317
      %v378 = vmul.f32 %v354, %v318
      %v379 = vmul.f32 %v354, %v319
      %v380 = vmul.f32 %v354, %v320
      %v381 = vmul.f32 %v354, %v321
      %v382 = vmul.f32 %v354, %v322
      %v383 = vmul.f32 %v354, %v323
      %v384 = vmul.f32 %v354, %v324
      %v385 = vmul.f32 %v359, %v325
      %v386 = vmul.f32 %v359, %v326
      %v387 = vmul.f32 %v359, %v327
      %v388 = vmul.f32 %v359, %v328
      %v389 = vmul.f32 %v359, %v329
      %v390 = vmul.f32 %v359, %v330
      %v391 = vmul.f32 %v359, %v331
      %v392 = vmul.f32 %v364, %v332
      %v393 = vmul.f32 %v364, %v333
      %v394 = vmul.f32 %v364, %v334
      %v395 = vmul.f32 %v364, %v335
      %v396 = vmul.f32 %v364, %v336
      %v397 = vmul.f32 %v364, %v337
      %v398 = vmul.f32 %v364, %v338
      %v399 = vmul.f32 %v369, %v339
      %v400 = vmul.f32 %v369, %v340
      %v401 = vmul.f32 %v369, %v341
      %v402 = vmul.f32 %v369, %v342
      %v403 = vmul.f32 %v369, %v343
      %v404 = vmul.f32 %v369, %v344
      %v405 = vmul.f32 %v369, %v345
      %406 = vst [vmem:[%s248] sm:$0xff] %v371
      %407 = vst [vmem:[%s248 + $0x8] sm:$0xff] %v372
      %408 = vst [vmem:[%s248 + $0x10] sm:$0xff] %v373
      %409 = vst [vmem:[%s248 + $0x18] sm:$0xff] %v374
      %410 = vst [vmem:[%s248 + $0x20] sm:$0xff] %v375
      %411 = vst [vmem:[%s248 + $0x28] sm:$0xff] %v376
      %vm412 = vcmask 130048
      %413 = vst.msk [vmem:[%s248 + $0x30] sm:$0xff] %vm412, %v377
      %414 = vst [vmem:[%s248 + $0x38] sm:$0xff] %v378
      %415 = vst [vmem:[%s248 + $0x40] sm:$0xff] %v379
      %416 = vst [vmem:[%s248 + $0x48] sm:$0xff] %v380
      %417 = vst [vmem:[%s248 + $0x50] sm:$0xff] %v381
      %418 = vst [vmem:[%s248 + $0x58] sm:$0xff] %v382
      %419 = vst [vmem:[%s248 + $0x60] sm:$0xff] %v383
      %420 = vst.msk [vmem:[%s248 + $0x68] sm:$0xff] %vm412, %v384
      %421 = vst [vmem:[%s248 + $0x70] sm:$0xff] %v385
      %422 = vst [vmem:[%s248 + $0x78] sm:$0xff] %v386
      %423 = vst [vmem:[%s248 + $0x80] sm:$0xff] %v387
      %424 = vst [vmem:[%s248 + $0x88] sm:$0xff] %v388
      %425 = vst [vmem:[%s248 + $0x90] sm:$0xff] %v389
      %426 = vst [vmem:[%s248 + $0x98] sm:$0xff] %v390
      %427 = vst.msk [vmem:[%s248 + $0xa0] sm:$0xff] %vm412, %v391
      %428 = vst [vmem:[%s248 + $0xa8] sm:$0xff] %v392
      %429 = vst [vmem:[%s248 + $0xb0] sm:$0xff] %v393
      %430 = vst [vmem:[%s248 + $0xb8] sm:$0xff] %v394
      %431 = vst [vmem:[%s248 + $0xc0] sm:$0xff] %v395
      %432 = vst [vmem:[%s248 + $0xc8] sm:$0xff] %v396
      %433 = vst [vmem:[%s248 + $0xd0] sm:$0xff] %v397
      %434 = vst.msk [vmem:[%s248 + $0xd8] sm:$0xff] %vm412, %v398
      %435 = vst [vmem:[%s248 + $0xe0] sm:$0xff] %v399
      %436 = vst [vmem:[%s248 + $0xe8] sm:$0xff] %v400
      %437 = vst [vmem:[%s248 + $0xf0] sm:$0xff] %v401
      %438 = vst [vmem:[%s248 + $0xf8] sm:$0xff] %v402
      %439 = vst [vmem:[%s248 + $0x100] sm:$0xff] %v403
      %440 = vst [vmem:[%s248 + $0x108] sm:$0xff] %v404
      %441 = vst.msk [vmem:[%s248 + $0x110] sm:$0xff] %vm412, %v405
      %s442 = smul.u32 5, %s15
      %p443 = scmp.lt.s32.totalorder %s442, 14
      %s444 = scalar_select %p443, %s442, 14
      %s445 = smul.addr %s444, 7
      %s446 = smul.addr %s445, 8
      %s447 = scalar_lea.vmem %s4, %s446
      // Predicated region
      $region37: #{tpu_custom_call.1} parent=35 // pred_check
        %p448 = pneg %p132
      $region38: #{tpu_custom_call.1} parent=35 // pred_check_branch
        %450 = sbr.rel (%p448) target = $region40
      $region39: #{tpu_custom_call.1} parent=35 // pred_region
        %s451 = smul.u32 5, %s15
      $region40: #{tpu_custom_call.1} parent=35 // pred_fallthru
        _
    $region36: #{tpu_custom_call.1} parent=5 // pred_fallthru
      _
    %p452 = scmp.le.s32.totalorder 2, %s10
    // Predicated region
    $region41: #{tpu_custom_call.1} parent=5 // pred_check
      %p453 = pneg %p452
    $region42: #{tpu_custom_call.1} parent=5 // pred_check_branch
      %455 = sbr.rel (%p453) target = $region44
    $region43: #{tpu_custom_call.1} parent=5 // pred_region
      %s456 = ssub.s32 %s10, 2
      // Predicated region
      $region45: #{tpu_custom_call.1} parent=43 // pred_check
        %p457 = pneg %p138
      $region46: #{tpu_custom_call.1} parent=43 // pred_check_branch
        %459 = sbr.rel (%p457) target = $region48
      $region47: #{tpu_custom_call.1} parent=43 // pred_region
        %s460 = smul.u32 5, %s16
        %p461 = scmp.lt.s32.totalorder %s460, 14
        %s462 = scalar_select %p461, %s460, 14
        %s463 = smul.addr %s462, 7
        %s464 = smul.addr %s463, 8
        %s465 = scalar_lea.vmem %s4, %s464
      $region48: #{tpu_custom_call.1} parent=43 // pred_fallthru
        _
    $region44: #{tpu_custom_call.1} parent=5 // pred_fallthru
      _
  $region6: #{tpu_custom_call.1} parent=0 // loop_footer
    %s14 = sadd.s32 1, %s10
  $region7: #{tpu_custom_call.1} parent=0 // loop_footer_branch
    %9 = sbr.rel target = $region3
  $region8: #{tpu_custom_call.1} parent=0 // loop_exit
    _

</llo_original>
